<compile_context>
chip_gen: v7x
topology: tpu7x:2x2x1
jax: 0.10.0
libtpu: 0.0.40
codegen_flags: <defaults>
</compile_context>

<pallas_src>
import functools

import jax
import jax.numpy as jnp
from jax.experimental import pallas as pl
from jax.experimental.pallas import tpu as pltpu

_LANE = 128
_OUT_PAD = 8          # sublane-padded output rows (out_dim <= 5)
_MAX_TB = 2048        # cap on per-step batch tile (lane axis)


def _round_up(n, m):
    return ((n + m - 1) // m) * m


# ----------------------------------------------------------------------------
# Kernel: out^T tile = W^T @ x^T tile + b^T        (1 vmatmul + 1 VPU add)
# ----------------------------------------------------------------------------
def _fused_affine_t_kernel(w_ref, b_ref, x_ref, out_ref):
    # w_ref: [8, K]   (resident)        b_ref: [8, 1] (resident)
    # x_ref: [K, tb]  (batch on lanes)  out_ref: [8, tb]
    acc = jnp.dot(w_ref[...], x_ref[...], preferred_element_type=jnp.float32)
    out_ref[...] = (acc + b_ref[...]).astype(out_ref.dtype)


# ----------------------------------------------------------------------------
# Jitted per-call path (pad/transpose x, pallas_call, slice back).
# Folded weights are plain traced arrays, so they are NOT re-folded per call.
# ----------------------------------------------------------------------------
@functools.partial(jax.jit, static_argnums=(3,))
def _forward_from_folded(x, w_t, b_t, out_dim):
    B, K = x.shape

    # --- batch tiling: b_pad multiple of 128, tb divides b_pad exactly -------
    b_pad = _round_up(max(B, 1), _LANE)
    n_blocks = b_pad // _LANE
    max_tb_blocks = _MAX_TB // _LANE
    # >=2 grid steps when possible (v7x dual-TC), and tb <= _MAX_TB
    min_steps = max(-(-n_blocks // max_tb_blocks), 2 if n_blocks >= 2 else 1)
    steps = min_steps
    while n_blocks % steps != 0:
        steps += 1
    tb = (n_blocks // steps) * _LANE

    # x^T with the batch (lane) axis zero-padded to b_pad; one fused XLA pass.
    x_t = jnp.pad(x.T, ((0, 0), (0, b_pad - B)))              # [K, b_pad]

    cost = pl.CostEstimate(
        flops=2 * _OUT_PAD * K * b_pad,
        transcendentals=0,
        bytes_accessed=4 * (K * b_pad + _OUT_PAD * K + _OUT_PAD
                            + _OUT_PAD * b_pad),
    )

    out_t = pl.pallas_call(
        _fused_affine_t_kernel,
        out_shape=jax.ShapeDtypeStruct((_OUT_PAD, b_pad), jnp.float32),
        grid_spec=pltpu.PrefetchScalarGridSpec(
            num_scalar_prefetch=0,
            grid=(steps,),
            in_specs=[
                pl.BlockSpec((_OUT_PAD, K), lambda i: (0, 0)),   # W^T resident
                pl.BlockSpec((_OUT_PAD, 1), lambda i: (0, 0)),   # b^T resident
                pl.BlockSpec((K, tb), lambda i: (0, i)),         # x^T tile
            ],
            out_specs=pl.BlockSpec((_OUT_PAD, tb), lambda i: (0, i)),
        ),
        compiler_params=pltpu.CompilerParams(
            dimension_semantics=("parallel",),
        ),
        cost_estimate=cost,
    )(w_t, b_t, x_t)

    # Slice off the sublane/lane padding and return batch-major [B, out_dim].
    return out_t[:out_dim, :B].T


# ----------------------------------------------------------------------------
# One-time algebraic fold (per adapter); exact up to f32 rounding.
# ----------------------------------------------------------------------------
def _fold_adapter(params, adapter_number):
    if adapter_number == 1:
        w, b, a, bb = params["w1"], params["b1"], params["a1"], params["bb1"]
    elif adapter_number == 2:
        w, b, a, bb = params["w2"], params["b2"], params["a2"], params["bb2"]
    else:
        raise ValueError("adapter_number not valid")

    w0, b0 = params["w0"], params["b0"]
    w_eff = w + a @ bb                    # [20, out]   LoRA folded into fc_k
    w_total = w0 @ w_eff                  # [10, out]   fc0 folded in
    b_total = b0 @ w_eff + b              # [1,  out]
    out_dim = int(w.shape[1])

    # Transposed + sublane-padded layout for the kernel.
    w_t = jnp.pad(w_total.T, ((0, _OUT_PAD - out_dim), (0, 0)))   # [8, 10]
    b_t = jnp.pad(b_total.T, ((0, _OUT_PAD - out_dim), (0, 0)))   # [8, 1]
    return jax.block_until_ready(w_t), jax.block_until_ready(b_t), out_dim


class ConditionalLoRAPallas:
    """Caches the folded weights per adapter; forward is a single jitted call."""

    def __init__(self, params):
        self.params = params
        self._folded = {}

    def __call__(self, x, adapter_number):
        if adapter_number not in (1, 2):
            raise ValueError("adapter_number not valid")
        if adapter_number not in self._folded:
            self._folded[adapter_number] = _fold_adapter(self.params, adapter_number)
        w_t, b_t, out_dim = self._folded[adapter_number]
        return _forward_from_folded(x, w_t, b_t, out_dim)


# ----------------------------------------------------------------------------
# Parameters / reference
# ----------------------------------------------------------------------------
def init_params(key):
    """Deterministic synthetic parameters matching the PyTorch module shapes.

    PyTorch stores Linear weight as [out, in]; we keep the transposed [in, out]
    layout for the math here.
    """
    ks = jax.random.split(key, 9)

    def uni(k, shape, fan_in):
        bound = 1.0 / jnp.sqrt(jnp.float32(fan_in))
        return jax.random.uniform(k, shape, jnp.float32, -bound, bound)

    rank = 4
    params = {
        # fc0: Linear(10, 20)
        "w0": uni(ks[0], (10, 20), 10),
        "b0": uni(ks[1], (1, 20), 10),
        # fc1: Linear(20, 5)
        "w1": uni(ks[2], (20, 5), 20),
        "b1": uni(ks[3], (1, 5), 20),
        # lora_adapter_1: Linear(20, 4) -> Linear(4, 5), no bias
        "a1": uni(ks[4], (20, rank), 20),
        "bb1": uni(ks[5], (rank, 5), rank),
        # fc2: Linear(20, 2)
        "w2": uni(ks[6], (20, 2), 20),
        "b2": uni(ks[7], (1, 2), 20),
        # lora_adapter_2: Linear(20, 4) -> Linear(4, 2), no bias
        "a2": uni(ks[8], (20, rank), 20),
        "bb2": uni(jax.random.fold_in(key, 99), (rank, 2), rank),
    }
    return params


def reference_forward(x, params, adapter_number):
    h = x @ params["w0"] + params["b0"]
    if adapter_number == 1:
        return h @ params["w1"] + params["b1"] + (h @ params["a1"]) @ params["bb1"]
    elif adapter_number == 2:
        return h @ params["w2"] + params["b2"] + (h @ params["a2"]) @ params["bb2"]
    raise ValueError("adapter_number not valid")


if __name__ == "__main__":
    key = jax.random.PRNGKey(0)
    pkey, xkey = jax.random.split(key)
    params = init_params(pkey)
    model = ConditionalLoRAPallas(params)

    batch = 2
    x = jax.random.normal(xkey, (batch, 10), jnp.float32)

    # adapter 1 path -> [2, 5]
    out1 = jax.block_until_ready(model(x, 1))
    ref1 = reference_forward(x, params, 1)
    assert out1.shape == (batch, 5)
    assert jnp.allclose(out1, ref1, atol=1e-5, rtol=1e-5)

    # adapter 2 path -> [2, 2]
    out2 = jax.block_until_ready(model(x, 2))
    ref2 = reference_forward(x, params, 2)
    assert out2.shape == (batch, 2)
    assert jnp.allclose(out2, ref2, atol=1e-5, rtol=1e-5)

    # repeat call hits both the folded-weight cache and the jit cache
    out1b = jax.block_until_ready(model(x, 1))
    assert jnp.allclose(out1b, ref1, atol=1e-5, rtol=1e-5)

    print("KERNEL_OK")
</pallas_src>

<mosaic_0001>
module attributes {stable_mosaic.version = 11 : i64} {
  func.func @_fused_affine_t_kernel(%arg0: i32, %arg1: memref<8x10xf32, #tpu.memory_space<vmem>>, %arg2: memref<8x1xf32, #tpu.memory_space<vmem>>, %arg3: memref<10x128xf32, #tpu.memory_space<vmem>>, %arg4: memref<8x128xf32, #tpu.memory_space<vmem>>) attributes {dimension_semantics = [#tpu.dimension_semantics<parallel>], iteration_bounds = array<i64: 1>, scalar_prefetch = 0 : i64, scratch_operands = 0 : i64, tpu.core_type = #tpu.core_type<tc>, window_params = [{pipeline_mode = #tpu.pipeline_mode<synchronous>, transform_indices = @transform_0, window_bounds = array<i64: 8, 10>}, {pipeline_mode = #tpu.pipeline_mode<synchronous>, transform_indices = @transform_1, window_bounds = array<i64: 8, 1>}, {transform_indices = @transform_2, window_bounds = array<i64: 10, 128>}, {transform_indices = @transform_3, window_bounds = array<i64: 8, 128>}]} {
    %c0 = arith.constant 0 : index
    %c0_0 = arith.constant 0 : index
    %0 = vector.load %arg1[%c0, %c0_0] : memref<8x10xf32, #tpu.memory_space<vmem>>, vector<8x10xf32>
    %c0_1 = arith.constant 0 : index
    %c0_2 = arith.constant 0 : index
    %1 = vector.load %arg3[%c0_1, %c0_2] : memref<10x128xf32, #tpu.memory_space<vmem>>, vector<10x128xf32>
    %cst = arith.constant dense<0.000000e+00> : vector<8x128xf32>
    %2 = tpu.matmul %0, %1, %cst {dimension_numbers = #tpu.dot_dimension_numbers<[1], [0], [0], [1], [0, 0, 1, 1], [], []>} : vector<8x10xf32>, vector<10x128xf32>, vector<8x128xf32> -> vector<8x128xf32>
    %c0_3 = arith.constant 0 : index
    %c0_4 = arith.constant 0 : index
    %3 = vector.load %arg2[%c0_3, %c0_4] : memref<8x1xf32, #tpu.memory_space<vmem>>, vector<8x1xf32>
    %4 = vector.broadcast %3 : vector<8x1xf32> to vector<8x128xf32>
    %5 = arith.addf %2, %4 : vector<8x128xf32>
    %c0_5 = arith.constant 0 : index
    %c0_6 = arith.constant 0 : index
    %6 = vector.load %arg4[%c0_5, %c0_6] : memref<8x128xf32, #tpu.memory_space<vmem>>, vector<8x128xf32>
    tpu.vector_store %arg4[%c0_5, %c0_6], %5 {strides = array<i32>} : memref<8x128xf32, #tpu.memory_space<vmem>>, vector<8x128xf32>,
    return
  }
  func.func @transform_0(%arg0: i32) -> (i32, i32) {
    %c0_i32 = arith.constant 0 : i32
    %c0_i32_0 = arith.constant 0 : i32
    %c0_i32_1 = arith.constant 0 : i32
    return %c0_i32, %c0_i32_0 : i32, i32
  }
  func.func @transform_1(%arg0: i32) -> (i32, i32) {
    %c0_i32 = arith.constant 0 : i32
    %c0_i32_0 = arith.constant 0 : i32
    %c0_i32_1 = arith.constant 0 : i32
    return %c0_i32, %c0_i32_0 : i32, i32
  }
  func.func @transform_2(%arg0: i32) -> (i32, i32) {
    %c0_i32 = arith.constant 0 : i32
    %c0_i32_0 = arith.constant 0 : i32
    return %c0_i32, %arg0 : i32, i32
  }
  func.func @transform_3(%arg0: i32) -> (i32, i32) {
    %c0_i32 = arith.constant 0 : i32
    %c0_i32_0 = arith.constant 0 : i32
    return %c0_i32, %arg0 : i32, i32
  }
}

</mosaic_0001>

<llo_original>
// kernel: _forward_from_folded.1
$region0: #{_forward_from_folded.1}
  #allocation0 [shape = 'u32[]', space=smem, size = 0x4, offset = 0x4, fixed_abs, tag = 'smem constant byte address 0x4 - core index']
  #allocation1 [shape = 'u32[144,128]{1,0:T(1,128)}', space=vmem, size = 0x12000, scoped, tag = 'internal scratch']
  %s0 = inlined_call_operand.vmem [shape: f32[8,10], index: 0, kind: input, shape index: {}]
  %s1 = inlined_call_operand.vmem [shape: f32[8,1], index: 1, kind: input, shape index: {}]
  %s2 = inlined_call_operand.vmem [shape: f32[10,128], index: 2, kind: input, shape index: {}]
  %s3 = inlined_call_operand.vmem [shape: f32[8,128], index: 3, kind: output, shape index: {}]
  %s4 = sld [smem:[#allocation0]]
  $region22: #{_forward_from_folded.1} parent=0
    _
  %s6 = ssub.s32 1, %s4
  %s7 = scalar_select 0, %s6, %s4
  // Predicated region
  $region2: #{_forward_from_folded.1} parent=0 // pred_check
    _
  $region3: #{_forward_from_folded.1} parent=0 // pred_check_branch
    %9 = sbr.rel (0) target = $region5
  $region4: #{_forward_from_folded.1} parent=0 // pred_region
    _
  $region5: #{_forward_from_folded.1} parent=0 // pred_fallthru
    _
  // Predicated region
  $region6: #{_forward_from_folded.1} parent=0 // pred_check
    _
  $region7: #{_forward_from_folded.1} parent=0 // pred_check_branch
    %11 = sbr.rel (0) target = $region9
  $region8: #{_forward_from_folded.1} parent=0 // pred_region
    _
  $region9: #{_forward_from_folded.1} parent=0 // pred_fallthru
    _
  // Predicated region
  $region10: #{_forward_from_folded.1} parent=0 // pred_check
    _
  $region11: #{_forward_from_folded.1} parent=0 // pred_check_branch
    %13 = sbr.rel (0) target = $region13
  $region12: #{_forward_from_folded.1} parent=0 // pred_region
    _
  $region13: #{_forward_from_folded.1} parent=0 // pred_fallthru
    _
  %v14 = vld [vmem:[%s0] sm:$0xff]
  %v15 = vld [vmem:[%s2] sm:$0xff]
  %v16 = vld [vmem:[%s2 + $0x8] sm:$0x3]
  %v17 = vld [vmem:[%s1] sm:$0xff]
  %19 = vset.pattern.permute.xlu0 0
  %20 = vperm.xlu0 %19, %v17
  %v21 = vpop.permute.xlu0 %20
  %vm23 = vcmask 80896
  %v25 = vsel %vm23, %v14, 0
  %vm27 = vcmask 1041408
  %v29 = vsel %vm27, %v16, 0
  %31 = vmatprep.subr.mxu0 0.0
  %32 = vmatpush1.msra.mxu0 %v15
  %33 = vmatprep.subr.mxu0 0.0
  %34 = vmatpush1.msra.mxu0 %v29
  %35 = vmatprep.subr.mxu0 0.0
  %36 = vmatpush1.msra.mxu0 0.0
  %37 = vmatprep.subr.mxu0 0.0
  %38 = vmatpush1.msra.mxu0 0.0
  %39 = vmatprep.subr.mxu0 0.0
  %40 = vmatpush1.msra.mxu0 0.0
  %41 = vmatprep.subr.mxu0 0.0
  %42 = vmatpush1.msra.mxu0 0.0
  %43 = vmatprep.subr.mxu0 0.0
  %44 = vmatpush1.msra.mxu0 0.0
  %45 = vmatprep.subr.mxu0 0.0
  %46 = vmatpush1.msra.mxu0 0.0
  %47 = vmatprep.subr.mxu0 0.0
  %48 = vmatpush1.msra.mxu0 0.0
  %49 = vmatprep.subr.mxu0 0.0
  %50 = vmatpush1.msra.mxu0 0.0
  %51 = vmatprep.subr.mxu0 0.0
  %52 = vmatpush1.msra.mxu0 0.0
  %53 = vmatprep.subr.mxu0 0.0
  %54 = vmatpush1.msra.mxu0 0.0
  %55 = vmatprep.subr.mxu0 0.0
  %56 = vmatpush1.msra.mxu0 0.0
  %57 = vmatprep.subr.mxu0 0.0
  %58 = vmatpush1.msra.mxu0 0.0
  %59 = vmatprep.subr.mxu0 0.0
  %60 = vmatpush1.msra.mxu0 0.0
  %61 = vmatprep.subr.mxu0 0.0
  %62 = vmatpush1.msra.mxu0 0.0
  %63 = vmatprep.subr.mxu0 0.0
  %64 = vmatpush1.msra.mxu0 0.0
  %65 = vmatprep.subr.mxu0 0.0
  %66 = vmatpush1.msra.mxu0 0.0
  %67 = vmatprep.subr.mxu0 0.0
  %68 = vmatpush1.msra.mxu0 0.0
  %69 = vmatprep.subr.mxu0 0.0
  %70 = vmatpush1.msra.mxu0 0.0
  %71 = vmatprep.subr.mxu0 0.0
  %72 = vmatpush1.msra.mxu0 0.0
  %73 = vmatprep.subr.mxu0 0.0
  %74 = vmatpush1.msra.mxu0 0.0
  %75 = vmatprep.subr.mxu0 0.0
  %76 = vmatpush1.msra.mxu0 0.0
  %77 = vmatprep.subr.mxu0 0.0
  %78 = vmatpush1.msra.mxu0 0.0
  %79 = vmatprep.subr.mxu0 0.0
  %80 = vmatpush1.msra.mxu0 0.0
  %81 = vmatprep.subr.mxu0 0.0
  %82 = vmatpush1.msra.mxu0 0.0
  %83 = vmatprep.subr.mxu0 0.0
  %84 = vmatpush1.msra.mxu0 0.0
  %85 = vmatprep.subr.mxu0 0.0
  %86 = vmatpush1.msra.mxu0 0.0
  %87 = vmatprep.subr.mxu0 0.0
  %88 = vmatpush1.msra.mxu0 0.0
  %89 = vmatprep.subr.mxu0 0.0
  %90 = vmatpush1.msra.mxu0 0.0
  %91 = vmatprep.subr.mxu0 0.0
  %92 = vmatpush1.msra.mxu0 0.0
  %93 = vmatprep.subr.mxu0 0.0
  %94 = vmatpush1.msra.mxu0 0.0
  %95 = vmatprep.mubr.f32.mxu0 0.0
  %96 = vmatmul.mubr.f32.gmra.mrb[0].mxu0 %v25
  %v97 = vpop.f32.mrb[0].mxu0
  %v98 = vadd.f32 %v21, %v97
  %v99 = vpop.f32.mrb[0].mxu0
  %100 = vdwg.mxu0
  %101 = vst [vmem:[%s3] sm:$0xff] %v98
  // Predicated region
  $region14: #{_forward_from_folded.1} parent=0 // pred_check
    _
  $region15: #{_forward_from_folded.1} parent=0 // pred_check_branch
    %103 = sbr.rel (0) target = $region17
  $region16: #{_forward_from_folded.1} parent=0 // pred_region
    _
  $region17: #{_forward_from_folded.1} parent=0 // pred_fallthru
    _
  // Predicated region
  $region18: #{_forward_from_folded.1} parent=0 // pred_check
    _
  $region19: #{_forward_from_folded.1} parent=0 // pred_check_branch
    %105 = sbr.rel (0) target = $region21
  $region20: #{_forward_from_folded.1} parent=0 // pred_region
    _
  $region21: #{_forward_from_folded.1} parent=0 // pred_fallthru
    _

</llo_original>
